<compile_context>
chip_gen: v7x
topology: tpu7x:2x2x1
jax: 0.10.0
libtpu: 0.0.40
codegen_flags: <defaults>
</compile_context>

<pallas_src>
import jax
import jax.numpy as jnp
from jax.experimental import pallas as pl
from jax.experimental.pallas import tpu as pltpu


def _logreg_kernel(x_ref, wt_ref, b_ref, o_ref):
    # x_ref:  (TB, K)   batch tile of inputs (caller dtype)
    # wt_ref: (K,  TN)  pre-transposed, lane-padded weight tile (compute dtype)
    # b_ref:  (1,  TN)  lane-padded bias tile (f32)
    # o_ref:  (TB, TN)  lane-dense output tile
    x = x_ref[...].astype(wt_ref.dtype)           # in-register cast -> native MXU rate
    logits = jax.lax.dot_general(
        x, wt_ref[...],
        dimension_numbers=(((1,), (0,)), ((), ())),
        preferred_element_type=jnp.float32,        # f32 accumulation
    )
    logits = logits + b_ref[...]                   # bias add in f32
    o_ref[...] = jax.nn.sigmoid(logits).astype(o_ref.dtype)   # exp on the EUP


def prepare_logreg_params(w, b, *, compute_dtype=jnp.bfloat16):
    """One-time weight prep (do this at model init, NOT per forward call).

    w: (out, in) PyTorch nn.Linear layout, b: (out,).
    Returns (wt, b2, n_out):
      wt: (in, out_pad) transposed, zero-padded to a multiple of 128 lanes,
          cast to the MXU feed dtype,
      b2: (1, out_pad) f32 bias (padded columns compute sigmoid(0)=0.5 and are
          sliced off by the wrapper).
    """
    n_out, k = w.shape
    n_pad = max(128, pl.cdiv(n_out, 128) * 128)
    wt = jnp.zeros((k, n_pad), dtype=compute_dtype)
    wt = wt.at[:, :n_out].set(w.T.astype(compute_dtype))
    b2 = jnp.zeros((1, n_pad), dtype=jnp.float32)
    b2 = b2.at[:, :n_out].set(b.astype(jnp.float32).reshape(1, n_out))
    return wt, b2, n_out


def logistic_regression(x, wt, b2, n_out, *, block_b=512, block_n=512,
                        out_dtype=None, return_padded=False):
    """sigmoid(x @ W.T + b) using params from prepare_logreg_params().

    x: (B, in). Returns (B, n_out), or the lane-padded (B, out_pad) slab when
    return_padded=True (skips the final slice for downstream consumers that
    tolerate padding).
    """
    B, K = x.shape
    Kw, N_pad = wt.shape
    assert Kw == K, f"weight K={Kw} != input K={K}"
    out_dtype = jnp.dtype(x.dtype if out_dtype is None else out_dtype)

    # --- batch tile: multiple of the sublane packing for the compute dtype,
    #     sized so the batch grid gets >= 2 steps whenever B allows it -------
    sub = 16 if wt.dtype == jnp.bfloat16 else 8
    if block_b <= 0 or block_b % sub:
        raise ValueError(f"block_b must be a positive multiple of {sub}")
    TB = min(block_b, max(sub, (pl.cdiv(B, 2) // sub) * sub))
    grid_b = pl.cdiv(B, TB)              # ragged last batch block is masked on store

    # --- out tile: lane-dense (multiple of 128); W^T already lane-padded ----
    if block_n % 128:
        raise ValueError("block_n must be a multiple of 128")
    TN = min(N_pad, block_n)
    grid_n = pl.cdiv(N_pad, TN)

    # Resident (constant index_map) operands don't need double-buffering.
    if grid_n == 1:
        wt_spec = pl.BlockSpec((K, TN), lambda i, j: (0, j),
                               pipeline_mode=pl.Buffered(1))
        b_spec = pl.BlockSpec((1, TN), lambda i, j: (0, j),
                              pipeline_mode=pl.Buffered(1))
        w_bufs = 1
    else:
        wt_spec = pl.BlockSpec((K, TN), lambda i, j: (0, j))
        b_spec = pl.BlockSpec((1, TN), lambda i, j: (0, j))
        w_bufs = 2

    # TODO(synk): for very large input_size (K >~ 4k) add a trailing
    # "arbitrary" K grid axis with an f32 VMEM accumulator (pl.when
    # init/finalize) so the x tile / W^T VMEM footprint stays bounded.

    # --- VMEM budget (v5e scoped default is only 16 MiB) --------------------
    vmem_need = (2 * TB * K * x.dtype.itemsize            # x, double-buffered
                 + w_bufs * K * TN * wt.dtype.itemsize    # W^T
                 + w_bufs * TN * 4                        # bias (f32)
                 + 2 * TB * TN * out_dtype.itemsize)      # out, double-buffered
    vmem_limit = int(min(max(2 * vmem_need, 16 * 1024 * 1024), 64 * 1024 * 1024))

    cost = pl.CostEstimate(
        flops=2 * B * K * N_pad,
        transcendentals=B * N_pad,
        bytes_accessed=(B * K * x.dtype.itemsize
                        + K * N_pad * wt.dtype.itemsize
                        + N_pad * 4
                        + B * N_pad * out_dtype.itemsize),
    )

    out = pl.pallas_call(
        _logreg_kernel,
        out_shape=jax.ShapeDtypeStruct((B, N_pad), out_dtype),
        grid_spec=pltpu.PrefetchScalarGridSpec(
            num_scalar_prefetch=0,
            grid=(grid_b, grid_n),
            in_specs=[
                pl.BlockSpec((TB, K), lambda i, j: (i, 0)),   # x: tiled over batch
                wt_spec,                                       # W^T
                b_spec,                                        # bias
            ],
            out_specs=pl.BlockSpec((TB, TN), lambda i, j: (i, j)),
        ),
        compiler_params=pltpu.CompilerParams(
            # Batch / out tiles are independent -> shard across TCs on v7x.
            dimension_semantics=("parallel", "parallel"),
            vmem_limit_bytes=vmem_limit,
        ),
        cost_estimate=cost,
    )(x, wt, b2)

    if return_padded or N_pad == n_out:
        return out
    return out[:, :n_out]


if __name__ == "__main__":
    # Small shapes consistent with the module: batch=8, input_size=32, output_size=16
    B, input_size, output_size = 8, 32, 16

    key = jax.random.PRNGKey(0)
    kx, kw, kb = jax.random.split(key, 3)

    x = jax.random.normal(kx, (B, input_size), dtype=jnp.float32)
    # Deterministic init mimicking nn.Linear's uniform(-1/sqrt(in), 1/sqrt(in))
    bound = 1.0 / jnp.sqrt(jnp.float32(input_size))
    w = jax.random.uniform(kw, (output_size, input_size), minval=-bound, maxval=bound,
                           dtype=jnp.float32)
    b = jax.random.uniform(kb, (output_size,), minval=-bound, maxval=bound,
                           dtype=jnp.float32)

    # Pure-JAX reference
    ref = jax.nn.sigmoid(x @ w.T + b)

    # f32 MXU feed: matches the reference tightly.
    wt32, b32, n_out = prepare_logreg_params(w, b, compute_dtype=jnp.float32)
    out32 = jax.block_until_ready(logistic_regression(x, wt32, b32, n_out))
    assert out32.shape == (B, output_size)
    assert jnp.allclose(out32, ref, atol=1e-5, rtol=1e-5)

    # bf16 MXU feed (default perf path): f32 accumulation, looser tolerance.
    wt16, b16, _ = prepare_logreg_params(w, b)          # compute_dtype=bf16
    out16 = jax.block_until_ready(logistic_regression(x, wt16, b16, n_out))
    assert out16.shape == (B, output_size)
    assert jnp.allclose(out16, ref, atol=2e-2, rtol=2e-2)

    print("KERNEL_OK")
</pallas_src>

<mosaic_0001>
module attributes {stable_mosaic.version = 11 : i64} {
  func.func @_logreg_kernel(%arg0: i32, %arg1: i32, %arg2: memref<8x32xf32, #tpu.memory_space<vmem>>, %arg3: memref<32x128xf32, #tpu.memory_space<vmem>>, %arg4: memref<1x128xf32, #tpu.memory_space<vmem>>, %arg5: memref<8x128xf32, #tpu.memory_space<vmem>>) attributes {dimension_semantics = [#tpu.dimension_semantics<parallel>, #tpu.dimension_semantics<parallel>], iteration_bounds = array<i64: 1, 1>, scalar_prefetch = 0 : i64, scratch_operands = 0 : i64, tpu.core_type = #tpu.core_type<tc>, window_params = [{transform_indices = @transform_0, window_bounds = array<i64: 8, 32>}, {pipeline_mode = #tpu.pipeline_mode<synchronous>, transform_indices = @transform_1, window_bounds = array<i64: 32, 128>}, {pipeline_mode = #tpu.pipeline_mode<synchronous>, transform_indices = @transform_2, window_bounds = array<i64: 1, 128>}, {transform_indices = @transform_3, window_bounds = array<i64: 8, 128>}]} {
    %c0 = arith.constant 0 : index
    %c0_0 = arith.constant 0 : index
    %0 = vector.load %arg2[%c0, %c0_0] : memref<8x32xf32, #tpu.memory_space<vmem>>, vector<8x32xf32>
    %c0_1 = arith.constant 0 : index
    %c0_2 = arith.constant 0 : index
    %1 = vector.load %arg3[%c0_1, %c0_2] : memref<32x128xf32, #tpu.memory_space<vmem>>, vector<32x128xf32>
    %cst = arith.constant dense<0.000000e+00> : vector<8x128xf32>
    %2 = tpu.matmul %0, %1, %cst {dimension_numbers = #tpu.dot_dimension_numbers<[1], [0], [0], [1], [0, 0, 1, 1], [], []>} : vector<8x32xf32>, vector<32x128xf32>, vector<8x128xf32> -> vector<8x128xf32>
    %c0_3 = arith.constant 0 : index
    %c0_4 = arith.constant 0 : index
    %3 = vector.load %arg4[%c0_3, %c0_4] : memref<1x128xf32, #tpu.memory_space<vmem>>, vector<1x128xf32>
    %4 = vector.broadcast %3 : vector<1x128xf32> to vector<8x128xf32>
    %5 = arith.addf %2, %4 : vector<8x128xf32>
    %6 = arith.negf %5 : vector<8x128xf32>
    %7 = math.exp %6 : vector<8x128xf32>
    %cst_5 = arith.constant 1.000000e+00 : f32
    %8 = vector.broadcast %cst_5 : f32 to vector<8x128xf32>
    %9 = arith.addf %8, %7 : vector<8x128xf32>
    %10 = arith.divf %8, %9 : vector<8x128xf32>
    %c0_6 = arith.constant 0 : index
    %c0_7 = arith.constant 0 : index
    %11 = vector.load %arg5[%c0_6, %c0_7] : memref<8x128xf32, #tpu.memory_space<vmem>>, vector<8x128xf32>
    tpu.vector_store %arg5[%c0_6, %c0_7], %10 {strides = array<i32>} : memref<8x128xf32, #tpu.memory_space<vmem>>, vector<8x128xf32>,
    return
  }
  func.func @transform_0(%arg0: i32, %arg1: i32) -> (i32, i32) {
    %c0_i32 = arith.constant 0 : i32
    %c0_i32_0 = arith.constant 0 : i32
    return %arg0, %c0_i32 : i32, i32
  }
  func.func @transform_1(%arg0: i32, %arg1: i32) -> (i32, i32) {
    %c0_i32 = arith.constant 0 : i32
    %c0_i32_0 = arith.constant 0 : i32
    return %c0_i32, %arg1 : i32, i32
  }
  func.func @transform_2(%arg0: i32, %arg1: i32) -> (i32, i32) {
    %c0_i32 = arith.constant 0 : i32
    %c0_i32_0 = arith.constant 0 : i32
    return %c0_i32, %arg1 : i32, i32
  }
  func.func @transform_3(%arg0: i32, %arg1: i32) -> (i32, i32) {
    %c0_i32 = arith.constant 0 : i32
    return %arg0, %arg1 : i32, i32
  }
}

</mosaic_0001>

<llo_original>
// kernel: tpu_custom_call.1
$region0: #{tpu_custom_call.1}
  #allocation0 [shape = 'u32[]', space=smem, size = 0x4, offset = 0x4, fixed_abs, tag = 'smem constant byte address 0x4 - core index']
  #allocation1 [shape = 'u32[144,128]{1,0:T(1,128)}', space=vmem, size = 0x12000, scoped, tag = 'internal scratch']
  %s0 = inlined_call_operand.hbm [shape: f32[8,32], index: 0, kind: input, shape index: {}]
  %s1 = inlined_call_operand.hbm [shape: f32[32,128], index: 1, kind: input, shape index: {}]
  %s2 = inlined_call_operand.vmem [shape: f32[1,128], index: 2, kind: input, shape index: {}]
  %s3 = inlined_call_operand.hbm [shape: f32[8,128], index: 3, kind: output, shape index: {}]
  %s4 = sld [smem:[#allocation0]]
  $region30: #{tpu_custom_call.1} parent=0
    _
  %s6 = ssub.s32 1, %s4
  %s7 = scalar_select 0, %s6, %s4
  $region1: #{tpu_custom_call.1} parent=0
    #allocation2 [shape = 'u8[4096]{0}', space=vmem, size = 0x1000, scoped, tag = 'input window, operand 0, single buffered']
    #allocation3 [shape = 's32[1]{0}', space=sflag, size = 0x4, scoped, tag = 'scoped memory for tpu_custom_call.1']
    #allocation4 [shape = 's32[1]{0}', space=sflag, size = 0x4, scoped, tag = 'scoped memory for tpu_custom_call.1']
    #allocation5 [shape = 'u8[16384]{0}', space=vmem, size = 0x4000, scoped, tag = 'input window, operand 1, single buffered']
    #allocation6 [shape = 's32[1]{0}', space=sflag, size = 0x4, scoped, tag = 'scoped memory for tpu_custom_call.1']
    #allocation7 [shape = 'u8[4096]{0}', space=vmem, size = 0x1000, scoped, tag = 'output window, operand 0, single buffered']
    %8 = vsyncpa [#allocation3], 0
    %9 = vsyncpa [#allocation6], 0
    %10 = vsyncpa [#allocation4], 0
    // Predicated region
    $region2: #{tpu_custom_call.1} parent=1 // pred_check
      _
    $region3: #{tpu_custom_call.1} parent=1 // pred_check_branch
      %12 = sbr.rel (0) target = $region5
    $region4: #{tpu_custom_call.1} parent=1 // pred_region
      %s14 = ssub.s32 128, 128
      %15 = vsyncadd [#allocation3], %s14
      %s17 = sshll.u32 [#allocation2], 4
      %s18 = int_to_ptr.vmem [resolvable:$true] %s17
      %20 = dma.hbm_to_vmem [thread:$0]  %s0, 128, %s18, [#allocation3]
    $region5: #{tpu_custom_call.1} parent=1 // pred_fallthru
      _
    // Predicated region
    $region6: #{tpu_custom_call.1} parent=1 // pred_check
      _
    $region7: #{tpu_custom_call.1} parent=1 // pred_check_branch
      %22 = sbr.rel (0) target = $region9
    $region8: #{tpu_custom_call.1} parent=1 // pred_region
      %s24 = ssub.s32 512, 512
      %25 = vsyncadd [#allocation6], %s24
      %s26 = sshll.u32 [#allocation5], 4
      %s27 = int_to_ptr.vmem [resolvable:$true] %s26
      %32 = dma.hbm_to_vmem [thread:$0]  %s1, 512, %s27, [#allocation6], 128, 128, 8
    $region9: #{tpu_custom_call.1} parent=1 // pred_fallthru
      _
    // Predicated region
    $region10: #{tpu_custom_call.1} parent=1 // pred_check
      _
    $region11: #{tpu_custom_call.1} parent=1 // pred_check_branch
      %34 = sbr.rel (0) target = $region13
    $region12: #{tpu_custom_call.1} parent=1 // pred_region
      _
    $region13: #{tpu_custom_call.1} parent=1 // pred_fallthru
      _
    // Predicated region
    $region14: #{tpu_custom_call.1} parent=1 // pred_check
      _
    $region15: #{tpu_custom_call.1} parent=1 // pred_check_branch
      %36 = sbr.rel (0) target = $region17
    $region16: #{tpu_custom_call.1} parent=1 // pred_region
      %37 = dma.done [#allocation3], 128
    $region17: #{tpu_custom_call.1} parent=1 // pred_fallthru
      _
    // Predicated region
    $region18: #{tpu_custom_call.1} parent=1 // pred_check
      _
    $region19: #{tpu_custom_call.1} parent=1 // pred_check_branch
      %39 = sbr.rel (0) target = $region21
    $region20: #{tpu_custom_call.1} parent=1 // pred_region
      %40 = dma.done [#allocation6], 512
    $region21: #{tpu_custom_call.1} parent=1 // pred_fallthru
      _
    %v41 = vld [vmem:[#allocation2] sm:$0xff]
    %v42 = vld [vmem:[#allocation5] sm:$0xff]
    %v43 = vld [vmem:[#allocation5 + $0x8] sm:$0xff]
    %v44 = vld [vmem:[#allocation5 + $0x10] sm:$0xff]
    %v45 = vld [vmem:[#allocation5 + $0x18] sm:$0xff]
    %v46 = vld [vmem:[%s2] sm:$0x1]
    %v48 = vlaneseq
    %v49 = vshrl.u32 %v48, 7
    %v50 = vsub.s32 0, %v49
    %v51 = vrot.slane %v46, %v50
    %vm53 = vcmask 261120
    %v55 = vsel %vm53, %v41, 0
    %57 = vmatprep.subr.mxu0 0.0
    %58 = vmatpush1.msra.mxu0 %v42
    %59 = vmatprep.subr.mxu0 0.0
    %60 = vmatpush1.msra.mxu0 %v43
    %61 = vmatprep.subr.mxu0 0.0
    %62 = vmatpush1.msra.mxu0 %v44
    %63 = vmatprep.subr.mxu0 0.0
    %64 = vmatpush1.msra.mxu0 %v45
    %65 = vmatprep.subr.mxu0 0.0
    %66 = vmatpush1.msra.mxu0 0.0
    %67 = vmatprep.subr.mxu0 0.0
    %68 = vmatpush1.msra.mxu0 0.0
    %69 = vmatprep.subr.mxu0 0.0
    %70 = vmatpush1.msra.mxu0 0.0
    %71 = vmatprep.subr.mxu0 0.0
    %72 = vmatpush1.msra.mxu0 0.0
    %73 = vmatprep.subr.mxu0 0.0
    %74 = vmatpush1.msra.mxu0 0.0
    %75 = vmatprep.subr.mxu0 0.0
    %76 = vmatpush1.msra.mxu0 0.0
    %77 = vmatprep.subr.mxu0 0.0
    %78 = vmatpush1.msra.mxu0 0.0
    %79 = vmatprep.subr.mxu0 0.0
    %80 = vmatpush1.msra.mxu0 0.0
    %81 = vmatprep.subr.mxu0 0.0
    %82 = vmatpush1.msra.mxu0 0.0
    %83 = vmatprep.subr.mxu0 0.0
    %84 = vmatpush1.msra.mxu0 0.0
    %85 = vmatprep.subr.mxu0 0.0
    %86 = vmatpush1.msra.mxu0 0.0
    %87 = vmatprep.subr.mxu0 0.0
    %88 = vmatpush1.msra.mxu0 0.0
    %89 = vmatprep.subr.mxu0 0.0
    %90 = vmatpush1.msra.mxu0 0.0
    %91 = vmatprep.subr.mxu0 0.0
    %92 = vmatpush1.msra.mxu0 0.0
    %93 = vmatprep.subr.mxu0 0.0
    %94 = vmatpush1.msra.mxu0 0.0
    %95 = vmatprep.subr.mxu0 0.0
    %96 = vmatpush1.msra.mxu0 0.0
    %97 = vmatprep.subr.mxu0 0.0
    %98 = vmatpush1.msra.mxu0 0.0
    %99 = vmatprep.subr.mxu0 0.0
    %100 = vmatpush1.msra.mxu0 0.0
    %101 = vmatprep.subr.mxu0 0.0
    %102 = vmatpush1.msra.mxu0 0.0
    %103 = vmatprep.subr.mxu0 0.0
    %104 = vmatpush1.msra.mxu0 0.0
    %105 = vmatprep.subr.mxu0 0.0
    %106 = vmatpush1.msra.mxu0 0.0
    %107 = vmatprep.subr.mxu0 0.0
    %108 = vmatpush1.msra.mxu0 0.0
    %109 = vmatprep.subr.mxu0 0.0
    %110 = vmatpush1.msra.mxu0 0.0
    %111 = vmatprep.subr.mxu0 0.0
    %112 = vmatpush1.msra.mxu0 0.0
    %113 = vmatprep.subr.mxu0 0.0
    %114 = vmatpush1.msra.mxu0 0.0
    %115 = vmatprep.subr.mxu0 0.0
    %116 = vmatpush1.msra.mxu0 0.0
    %117 = vmatprep.subr.mxu0 0.0
    %118 = vmatpush1.msra.mxu0 0.0
    %119 = vmatprep.subr.mxu0 0.0
    %120 = vmatpush1.msra.mxu0 0.0
    %121 = vmatprep.mubr.f32.mxu0 0.0
    %122 = vmatmul.mubr.f32.gmra.mrb[0].mxu0 %v55
    %v123 = vpop.f32.mrb[0].mxu0
    %v124 = vadd.f32 %v51, %v123
    %v125 = vpop.f32.mrb[0].mxu0
    %126 = vdwg.mxu0
    %v127 = vxor.u32 %v124, 2147483648
    %v128 = vmul.f32 %v127, 1.442695
    %v129 = vpow.pop %v128
    %v130 = vadd.f32 %v129, 1.0
    %v131 = vrcp.pop %v130
    %v132 = vmul.f32 1.0, %v131
    %133 = vst [vmem:[#allocation7] sm:$0xff] %v132
    // Predicated region
    $region22: #{tpu_custom_call.1} parent=1 // pred_check
      _
    $region23: #{tpu_custom_call.1} parent=1 // pred_check_branch
      %135 = sbr.rel (0) target = $region25
    $region24: #{tpu_custom_call.1} parent=1 // pred_region
      %s137 = ssub.s32 128, 128
      %138 = vsyncadd [#allocation4], %s137
      %s140 = sshll.u32 [#allocation7], 4
      %s141 = int_to_ptr.vmem [resolvable:$true] %s140
      %143 = dma.vmem_to_hbm [thread:$0]  %s141, 128, %s3, [#allocation4]
    $region25: #{tpu_custom_call.1} parent=1 // pred_fallthru
      _
    // Predicated region
    $region26: #{tpu_custom_call.1} parent=1 // pred_check
      _
    $region27: #{tpu_custom_call.1} parent=1 // pred_check_branch
      %145 = sbr.rel (0) target = $region29
    $region28: #{tpu_custom_call.1} parent=1 // pred_region
      %146 = dma.done [#allocation4], 128
    $region29: #{tpu_custom_call.1} parent=1 // pred_fallthru
      _
    %147 = vsyncpa [#allocation3], 1
    %148 = vsyncpa [#allocation6], 1
    %149 = vsyncpa [#allocation4], 1

</llo_original>
